<compile_context>
chip_gen: v7x
topology: tpu7x:2x2x1
jax: 0.10.0
libtpu: 0.0.40
codegen_flags: <defaults>
</compile_context>

<pallas_src>
import jax
import jax.numpy as jnp
from jax.experimental import pallas as pl
from jax.experimental.pallas import tpu as pltpu


MAX_TILE_R = 4096          # rows of 128 lanes per grid step (= 131072 samples)
SAMPLES_PER_ROW = 32       # 32 samples * 4 features = 128 lanes


def _cdiv(a, b):
    return (a + b - 1) // b


def _round_up(a, b):
    return _cdiv(a, b) * b


def _discriminator_kernel(x_ref, m1_ref, b1_ref, m2_ref, b2_ref, o_ref):
    # x_ref : VMEM (Tr, 128)  row r = 32 samples, each as 4 consecutive lanes
    # m1_ref: VMEM (128, 96)  kron(I_32, W1^T)  (block-diagonal layer-1 weights)
    # b1_ref: VMEM (1, 96)    b1 tiled 32x  (lane 3s+j -> b1[j])
    # m2_ref: VMEM (96, 32)   kron(I_32, W2^T)  (layer-2 weights + compaction)
    # b2_ref: VMEM (1, 32)    b2 broadcast
    # o_ref : VMEM (Tr, 32)   lane t of row r = probability of sample 32*r + t
    x = x_ref[...]

    # Layer 1: Linear(4,3) + Sigmoid, applied to all 32 samples of a row at
    # once via the block-diagonal matmul (MXU).  Bias add on VPU, sigmoid on EUP.
    z1 = jnp.dot(x, m1_ref[...], preferred_element_type=jnp.float32) + b1_ref[...]
    h = jax.nn.sigmoid(z1)                      # (Tr, 96)

    # Layer 2: Linear(3,1) + Sigmoid.  The same block-diagonal trick also
    # compacts the per-sample results to one dense lane per sample.
    z2 = jnp.dot(h, m2_ref[...], preferred_element_type=jnp.float32) + b2_ref[...]
    o_ref[...] = jax.nn.sigmoid(z2)             # (Tr, 32)


def discriminator_forward(x, w1, b1, w2, b2, *, max_tile_r=MAX_TILE_R):
    """x: (B, 4), params in torch nn.Linear (out, in) layout -> (B, 1) f32."""
    x = jnp.asarray(x, jnp.float32)
    w1 = jnp.asarray(w1, jnp.float32)
    b1 = jnp.asarray(b1, jnp.float32)
    w2 = jnp.asarray(w2, jnp.float32)
    b2 = jnp.asarray(b2, jnp.float32)
    B = x.shape[0]

    # Pack 32 samples per 128-lane row.  When B % 32 == 0 (the common case)
    # this reshape is a free row-major bitcast -- no extra HBM pass.
    pad = (-B) % SAMPLES_PER_ROW
    if pad:
        x = jnp.pad(x, ((0, pad), (0, 0)))      # tiny alignment pad only
    xp = x.reshape(-1, 4 * SAMPLES_PER_ROW)     # (R, 128)
    R = xp.shape[0]

    # Tile: as large as comfortably fits VMEM (>= 1 MiB payload/step), but
    # split into >= 2 tiles when possible so v7x's two TensorCores both work.
    tile_r = max(8, min(max_tile_r, _round_up(_cdiv(R, 2), 8)))
    n_tiles = _cdiv(R, tile_r)

    # One-time parameter packing (tiny; in practice precomputed per update).
    eye = jnp.eye(SAMPLES_PER_ROW, dtype=jnp.float32)
    m1 = jnp.kron(eye, w1.T)                    # (128, 96)
    m2 = jnp.kron(eye, w2.T)                    # (96, 32)
    b1p = jnp.tile(b1, SAMPLES_PER_ROW)[None, :]  # (1, 96)
    b2p = jnp.tile(b2, SAMPLES_PER_ROW)[None, :]  # (1, 32)

    out = pl.pallas_call(
        _discriminator_kernel,
        out_shape=jax.ShapeDtypeStruct((R, SAMPLES_PER_ROW), jnp.float32),
        grid=(n_tiles,),
        in_specs=[
            pl.BlockSpec((tile_r, 128), lambda i: (i, 0)),   # x tile
            pl.BlockSpec((128, 96), lambda i: (0, 0)),       # m1 (fetched once)
            pl.BlockSpec((1, 96), lambda i: (0, 0)),         # b1 pattern
            pl.BlockSpec((96, 32), lambda i: (0, 0)),        # m2
            pl.BlockSpec((1, 32), lambda i: (0, 0)),         # b2 pattern
        ],
        out_specs=pl.BlockSpec((tile_r, SAMPLES_PER_ROW), lambda i: (i, 0)),
        compiler_params=pltpu.CompilerParams(
            dimension_semantics=("parallel",),
            vmem_limit_bytes=48 * 1024 * 1024,
        ),
    )(xp, m1, b1p, m2, b2p)

    y = out.reshape(-1, 1)                      # (R*32, 1) -- free bitcast
    if pad:
        y = y[:B]
    return y


def _ref_forward(x, w1, b1, w2, b2):
    h = jax.nn.sigmoid(x @ w1.T + b1)
    return jax.nn.sigmoid(h @ w2.T + b2)


if __name__ == "__main__":
    key = jax.random.PRNGKey(0)
    k_x, k_w1, k_b1, k_w2, k_b2 = jax.random.split(key, 5)

    B = 2048  # multiple of 32 -> fully free reshapes; 2 grid tiles
    x = jax.random.normal(k_x, (B, 4), dtype=jnp.float32)

    # Parameters in torch nn.Linear layout: weight (out, in), bias (out,)
    bound1 = 1.0 / jnp.sqrt(4.0)
    w1 = jax.random.uniform(k_w1, (3, 4), jnp.float32, -bound1, bound1)
    b1 = jax.random.uniform(k_b1, (3,), jnp.float32, -bound1, bound1)
    bound2 = 1.0 / jnp.sqrt(3.0)
    w2 = jax.random.uniform(k_w2, (1, 3), jnp.float32, -bound2, bound2)
    b2 = jax.random.uniform(k_b2, (1,), jnp.float32, -bound2, bound2)

    out = discriminator_forward(x, w1, b1, w2, b2)
    out = jax.block_until_ready(out)

    ref = _ref_forward(x, w1, b1, w2, b2)
    assert out.shape == (B, 1)
    # f32 matmul on the MXU (multi-pass accumulation) vs. XLA reference.
    assert jnp.allclose(out, ref, atol=1e-4, rtol=1e-4)

    print("KERNEL_OK")
</pallas_src>

<mosaic_0001>
module attributes {stable_mosaic.version = 11 : i64} {
  func.func @_discriminator_kernel(%arg0: i32, %arg1: memref<32x128xf32, #tpu.memory_space<vmem>>, %arg2: memref<128x96xf32, #tpu.memory_space<vmem>>, %arg3: memref<1x96xf32, #tpu.memory_space<vmem>>, %arg4: memref<96x32xf32, #tpu.memory_space<vmem>>, %arg5: memref<1x32xf32, #tpu.memory_space<vmem>>, %arg6: memref<32x32xf32, #tpu.memory_space<vmem>>) attributes {dimension_semantics = [#tpu.dimension_semantics<parallel>], iteration_bounds = array<i64: 2>, scalar_prefetch = 0 : i64, scratch_operands = 0 : i64, tpu.core_type = #tpu.core_type<tc>, window_params = [{transform_indices = @transform_0, window_bounds = array<i64: 32, 128>}, {pipeline_mode = #tpu.pipeline_mode<synchronous>, transform_indices = @transform_1, window_bounds = array<i64: 128, 96>}, {pipeline_mode = #tpu.pipeline_mode<synchronous>, transform_indices = @transform_2, window_bounds = array<i64: 1, 96>}, {pipeline_mode = #tpu.pipeline_mode<synchronous>, transform_indices = @transform_3, window_bounds = array<i64: 96, 32>}, {pipeline_mode = #tpu.pipeline_mode<synchronous>, transform_indices = @transform_4, window_bounds = array<i64: 1, 32>}, {transform_indices = @transform_5, window_bounds = array<i64: 32, 32>}]} {
    %c0 = arith.constant 0 : index
    %c0_0 = arith.constant 0 : index
    %0 = vector.load %arg1[%c0, %c0_0] : memref<32x128xf32, #tpu.memory_space<vmem>>, vector<32x128xf32>
    %c0_1 = arith.constant 0 : index
    %c0_2 = arith.constant 0 : index
    %1 = vector.load %arg2[%c0_1, %c0_2] : memref<128x96xf32, #tpu.memory_space<vmem>>, vector<128x96xf32>
    %cst = arith.constant dense<0.000000e+00> : vector<32x96xf32>
    %2 = tpu.matmul %0, %1, %cst {dimension_numbers = #tpu.dot_dimension_numbers<[1], [0], [0], [1], [0, 0, 1, 1], [], []>} : vector<32x128xf32>, vector<128x96xf32>, vector<32x96xf32> -> vector<32x96xf32>
    %c0_3 = arith.constant 0 : index
    %c0_4 = arith.constant 0 : index
    %3 = vector.load %arg3[%c0_3, %c0_4] : memref<1x96xf32, #tpu.memory_space<vmem>>, vector<1x96xf32>
    %4 = vector.broadcast %3 : vector<1x96xf32> to vector<32x96xf32>
    %5 = arith.addf %2, %4 : vector<32x96xf32>
    %6 = arith.negf %5 : vector<32x96xf32>
    %7 = math.exp %6 : vector<32x96xf32>
    %cst_5 = arith.constant 1.000000e+00 : f32
    %8 = vector.broadcast %cst_5 : f32 to vector<32x96xf32>
    %9 = arith.addf %8, %7 : vector<32x96xf32>
    %10 = arith.divf %8, %9 : vector<32x96xf32>
    %c0_6 = arith.constant 0 : index
    %c0_7 = arith.constant 0 : index
    %11 = vector.load %arg4[%c0_6, %c0_7] : memref<96x32xf32, #tpu.memory_space<vmem>>, vector<96x32xf32>
    %cst_8 = arith.constant dense<0.000000e+00> : vector<32x32xf32>
    %12 = tpu.matmul %10, %11, %cst_8 {dimension_numbers = #tpu.dot_dimension_numbers<[1], [0], [0], [1], [0, 0, 1, 1], [], []>} : vector<32x96xf32>, vector<96x32xf32>, vector<32x32xf32> -> vector<32x32xf32>
    %c0_9 = arith.constant 0 : index
    %c0_10 = arith.constant 0 : index
    %13 = vector.load %arg5[%c0_9, %c0_10] : memref<1x32xf32, #tpu.memory_space<vmem>>, vector<1x32xf32>
    %14 = vector.broadcast %13 : vector<1x32xf32> to vector<32x32xf32>
    %15 = arith.addf %12, %14 : vector<32x32xf32>
    %16 = arith.negf %15 : vector<32x32xf32>
    %17 = math.exp %16 : vector<32x32xf32>
    %cst_11 = arith.constant 1.000000e+00 : f32
    %18 = vector.broadcast %cst_11 : f32 to vector<32x32xf32>
    %19 = arith.addf %18, %17 : vector<32x32xf32>
    %20 = arith.divf %18, %19 : vector<32x32xf32>
    %c0_12 = arith.constant 0 : index
    %c0_13 = arith.constant 0 : index
    %21 = vector.load %arg6[%c0_12, %c0_13] : memref<32x32xf32, #tpu.memory_space<vmem>>, vector<32x32xf32>
    tpu.vector_store %arg6[%c0_12, %c0_13], %20 {strides = array<i32>} : memref<32x32xf32, #tpu.memory_space<vmem>>, vector<32x32xf32>,
    return
  }
  func.func @transform_0(%arg0: i32) -> (i32, i32) {
    %c0_i32 = arith.constant 0 : i32
    %c0_i32_0 = arith.constant 0 : i32
    return %arg0, %c0_i32 : i32, i32
  }
  func.func @transform_1(%arg0: i32) -> (i32, i32) {
    %c0_i32 = arith.constant 0 : i32
    %c0_i32_0 = arith.constant 0 : i32
    %c0_i32_1 = arith.constant 0 : i32
    return %c0_i32, %c0_i32_0 : i32, i32
  }
  func.func @transform_2(%arg0: i32) -> (i32, i32) {
    %c0_i32 = arith.constant 0 : i32
    %c0_i32_0 = arith.constant 0 : i32
    %c0_i32_1 = arith.constant 0 : i32
    return %c0_i32, %c0_i32_0 : i32, i32
  }
  func.func @transform_3(%arg0: i32) -> (i32, i32) {
    %c0_i32 = arith.constant 0 : i32
    %c0_i32_0 = arith.constant 0 : i32
    %c0_i32_1 = arith.constant 0 : i32
    return %c0_i32, %c0_i32_0 : i32, i32
  }
  func.func @transform_4(%arg0: i32) -> (i32, i32) {
    %c0_i32 = arith.constant 0 : i32
    %c0_i32_0 = arith.constant 0 : i32
    %c0_i32_1 = arith.constant 0 : i32
    return %c0_i32, %c0_i32_0 : i32, i32
  }
  func.func @transform_5(%arg0: i32) -> (i32, i32) {
    %c0_i32 = arith.constant 0 : i32
    %c0_i32_0 = arith.constant 0 : i32
    return %arg0, %c0_i32 : i32, i32
  }
}

</mosaic_0001>

<llo_original>
// kernel: tpu_custom_call.1
$region0: #{tpu_custom_call.1}
  #allocation0 [shape = 'u32[]', space=smem, size = 0x4, offset = 0x4, fixed_abs, tag = 'smem constant byte address 0x4 - core index']
  #allocation1 [shape = 'u32[144,128]{1,0:T(1,128)}', space=vmem, size = 0x12000, scoped, tag = 'internal scratch']
  %s0 = inlined_call_operand.vmem [shape: f32[64,128], index: 0, kind: input, shape index: {}]
  %s1 = inlined_call_operand.vmem [shape: f32[128,96], index: 1, kind: input, shape index: {}]
  %s2 = inlined_call_operand.vmem [shape: f32[1,96], index: 2, kind: input, shape index: {}]
  %s3 = inlined_call_operand.vmem [shape: f32[96,32], index: 3, kind: input, shape index: {}]
  %s4 = inlined_call_operand.vmem [shape: f32[1,32], index: 4, kind: input, shape index: {}]
  %s5 = inlined_call_operand.vmem [shape: f32[64,32], index: 5, kind: output, shape index: {}]
  %s6 = sld [smem:[#allocation0]]
  $region53: #{tpu_custom_call.1} parent=0
    _
  %s8 = ssub.s32 1, %s6
  %s9 = scalar_select 0, %s8, %s6
  loop: start=0, step=1, limit=4
  $region2: #{tpu_custom_call.1} parent=0 // loop_pre_header
    _
  $region3: #{tpu_custom_call.1} parent=0 // loop_header
    %s11 = sphi 0, %s15
    %p12 = scmp.ge.s32.totalorder %s11, 4
    %s21 = sphi 0, %s23
    %s24 = sphi 0, %s21
    %s25 = sphi 0, %s24
    %s41 = sphi 0, %s25
    %s45 = sphi 0, %s45
    %s47 = sphi 0, %s45
    %s48 = sphi 0, %s47
    %s62 = sphi 0, %s48
    %s66 = sphi 0, %s66
    %s68 = sphi 0, %s66
    %s69 = sphi 0, %s68
    %s83 = sphi 0, %s69
    %s87 = sphi 0, %s87
    %s89 = sphi 0, %s87
    %s90 = sphi 0, %s89
    %s104 = sphi 0, %s90
    %s108 = sphi 0, %s108
    %s110 = sphi 0, %s108
    %s111 = sphi 0, %s110
    %s125 = sphi 0, %s111
    %s131 = sphi 0, %s133
    %s134 = sphi 0, %s131
    %s135 = sphi 0, %s134
    %s151 = sphi 0, %s135
  $region4: #{tpu_custom_call.1} parent=0 // loop_header_branch
    %14 = sbr.rel (%p12) target = $region8
  $region5: #{tpu_custom_call.1} parent=0 // loop_body
    %s16 = ssub.s32 %s11, 1
    %s17 = ssub.s32 %s11, 2
    %s18 = sadd.s32 %s11, 1
    %s19 = ssub.s32 %s11, %s18
    %p20 = scmp.eq.s32.totalorder %s19, 0
    %s22 = sadd.s32 %s21, 1
    %s23 = scalar_select %p20, %s21, %s22
    %p26 = pneg %p20
    %p27 = scmp.eq.s32.totalorder %s11, 1
    %p28 = por %p26, %p27
    %p29 = scmp.ne.s32.totalorder %s21, %s24
    %p30 = scmp.eq.s32.totalorder %s11, 0
    %p31 = por %p29, %p30
    %p32 = scmp.ne.s32.totalorder %s21, %s24
    %p33 = scmp.eq.s32.totalorder %s16, 1
    %p34 = por %p32, %p33
    %p35 = scmp.ne.s32.totalorder %s24, %s25
    %p36 = scmp.eq.s32.totalorder %s16, 0
    %p37 = por %p35, %p36
    %p38 = scmp.ne.s32.totalorder %s24, %s25
    %p39 = scmp.eq.s32.totalorder %s17, 1
    %p40 = por %p38, %p39
    %p42 = scmp.ne.s32.totalorder %s25, %s41
    %p43 = scmp.eq.s32.totalorder %s17, 0
    %p44 = por %p42, %p43
    %s46 = sadd.s32 %s45, 1
    %p49 = scmp.eq.s32.totalorder %s11, 1
    %p50 = scmp.ne.s32.totalorder %s45, %s47
    %p51 = scmp.eq.s32.totalorder %s11, 0
    %p52 = por %p50, %p51
    %p53 = scmp.ne.s32.totalorder %s45, %s47
    %p54 = scmp.eq.s32.totalorder %s16, 1
    %p55 = por %p53, %p54
    %p56 = scmp.ne.s32.totalorder %s47, %s48
    %p57 = scmp.eq.s32.totalorder %s16, 0
    %p58 = por %p56, %p57
    %p59 = scmp.ne.s32.totalorder %s47, %s48
    %p60 = scmp.eq.s32.totalorder %s17, 1
    %p61 = por %p59, %p60
    %p63 = scmp.ne.s32.totalorder %s48, %s62
    %p64 = scmp.eq.s32.totalorder %s17, 0
    %p65 = por %p63, %p64
    %s67 = sadd.s32 %s66, 1
    %p70 = scmp.eq.s32.totalorder %s11, 1
    %p71 = scmp.ne.s32.totalorder %s66, %s68
    %p72 = scmp.eq.s32.totalorder %s11, 0
    %p73 = por %p71, %p72
    %p74 = scmp.ne.s32.totalorder %s66, %s68
    %p75 = scmp.eq.s32.totalorder %s16, 1
    %p76 = por %p74, %p75
    %p77 = scmp.ne.s32.totalorder %s68, %s69
    %p78 = scmp.eq.s32.totalorder %s16, 0
    %p79 = por %p77, %p78
    %p80 = scmp.ne.s32.totalorder %s68, %s69
    %p81 = scmp.eq.s32.totalorder %s17, 1
    %p82 = por %p80, %p81
    %p84 = scmp.ne.s32.totalorder %s69, %s83
    %p85 = scmp.eq.s32.totalorder %s17, 0
    %p86 = por %p84, %p85
    %s88 = sadd.s32 %s87, 1
    %p91 = scmp.eq.s32.totalorder %s11, 1
    %p92 = scmp.ne.s32.totalorder %s87, %s89
    %p93 = scmp.eq.s32.totalorder %s11, 0
    %p94 = por %p92, %p93
    %p95 = scmp.ne.s32.totalorder %s87, %s89
    %p96 = scmp.eq.s32.totalorder %s16, 1
    %p97 = por %p95, %p96
    %p98 = scmp.ne.s32.totalorder %s89, %s90
    %p99 = scmp.eq.s32.totalorder %s16, 0
    %p100 = por %p98, %p99
    %p101 = scmp.ne.s32.totalorder %s89, %s90
    %p102 = scmp.eq.s32.totalorder %s17, 1
    %p103 = por %p101, %p102
    %p105 = scmp.ne.s32.totalorder %s90, %s104
    %p106 = scmp.eq.s32.totalorder %s17, 0
    %p107 = por %p105, %p106
    %s109 = sadd.s32 %s108, 1
    %p112 = scmp.eq.s32.totalorder %s11, 1
    %p113 = scmp.ne.s32.totalorder %s108, %s110
    %p114 = scmp.eq.s32.totalorder %s11, 0
    %p115 = por %p113, %p114
    %p116 = scmp.ne.s32.totalorder %s108, %s110
    %p117 = scmp.eq.s32.totalorder %s16, 1
    %p118 = por %p116, %p117
    %p119 = scmp.ne.s32.totalorder %s110, %s111
    %p120 = scmp.eq.s32.totalorder %s16, 0
    %p121 = por %p119, %p120
    %p122 = scmp.ne.s32.totalorder %s110, %s111
    %p123 = scmp.eq.s32.totalorder %s17, 1
    %p124 = por %p122, %p123
    %p126 = scmp.ne.s32.totalorder %s111, %s125
    %p127 = scmp.eq.s32.totalorder %s17, 0
    %p128 = por %p126, %p127
    %s129 = ssub.s32 %s11, %s18
    %p130 = scmp.eq.s32.totalorder %s129, 0
    %s132 = sadd.s32 %s131, 1
    %s133 = scalar_select %p130, %s131, %s132
    %p136 = pneg %p130
    %p137 = scmp.eq.s32.totalorder %s11, 1
    %p138 = por %p136, %p137
    %p139 = scmp.ne.s32.totalorder %s131, %s134
    %p140 = scmp.eq.s32.totalorder %s11, 0
    %p141 = por %p139, %p140
    %p142 = scmp.ne.s32.totalorder %s131, %s134
    %p143 = scmp.eq.s32.totalorder %s16, 1
    %p144 = por %p142, %p143
    %p145 = scmp.ne.s32.totalorder %s134, %s135
    %p146 = scmp.eq.s32.totalorder %s16, 0
    %p147 = por %p145, %p146
    %p148 = scmp.ne.s32.totalorder %s134, %s135
    %p149 = scmp.eq.s32.totalorder %s17, 1
    %p150 = por %p148, %p149
    %p152 = scmp.ne.s32.totalorder %s135, %s151
    %p153 = scmp.eq.s32.totalorder %s17, 0
    %p154 = por %p152, %p153
    %p155 = scmp.le.s32.totalorder 1, %s11
    %p156 = scmp.lt.s32.totalorder %s11, 3
    %p157 = pnand %p155, %p156
    %p158 = pneg %p157
    // Predicated region
    $region9: #{tpu_custom_call.1} parent=5 // pred_check
      _
    $region10: #{tpu_custom_call.1} parent=5 // pred_check_branch
      %160 = sbr.rel (%p157) target = $region12
    $region11: #{tpu_custom_call.1} parent=5 // pred_region
      %s161 = ssub.s32 %s11, 1
      // Predicated region
      $region13: #{tpu_custom_call.1} parent=11 // pred_check
        %p162 = pneg %p58
      $region14: #{tpu_custom_call.1} parent=11 // pred_check_branch
        %164 = sbr.rel (%p162) target = $region16
      $region15: #{tpu_custom_call.1} parent=11 // pred_region
        _
      $region16: #{tpu_custom_call.1} parent=11 // pred_fallthru
        _
      // Predicated region
      $region17: #{tpu_custom_call.1} parent=11 // pred_check
        %p165 = pneg %p79
      $region18: #{tpu_custom_call.1} parent=11 // pred_check_branch
        %167 = sbr.rel (%p165) target = $region20
      $region19: #{tpu_custom_call.1} parent=11 // pred_region
        _
      $region20: #{tpu_custom_call.1} parent=11 // pred_fallthru
        _
      // Predicated region
      $region21: #{tpu_custom_call.1} parent=11 // pred_check
        %p168 = pneg %p100
      $region22: #{tpu_custom_call.1} parent=11 // pred_check_branch
        %170 = sbr.rel (%p168) target = $region24
      $region23: #{tpu_custom_call.1} parent=11 // pred_region
        _
      $region24: #{tpu_custom_call.1} parent=11 // pred_fallthru
        _
      // Predicated region
      $region25: #{tpu_custom_call.1} parent=11 // pred_check
        %p171 = pneg %p121
      $region26: #{tpu_custom_call.1} parent=11 // pred_check_branch
        %173 = sbr.rel (%p171) target = $region28
      $region27: #{tpu_custom_call.1} parent=11 // pred_region
        _
      $region28: #{tpu_custom_call.1} parent=11 // pred_fallthru
        _
    $region12: #{tpu_custom_call.1} parent=5 // pred_fallthru
      _
    %p174 = scmp.lt.s32.totalorder %s11, 2
    // Predicated region
    $region29: #{tpu_custom_call.1} parent=5 // pred_check
      %p175 = pneg %p174
    $region30: #{tpu_custom_call.1} parent=5 // pred_check_branch
      %177 = sbr.rel (%p175) target = $region32
    $region31: #{tpu_custom_call.1} parent=5 // pred_region
      // Predicated region
      $region33: #{tpu_custom_call.1} parent=31 // pred_check
        %p178 = pneg %p31
      $region34: #{tpu_custom_call.1} parent=31 // pred_check_branch
        %180 = sbr.rel (%p178) target = $region36
      $region35: #{tpu_custom_call.1} parent=31 // pred_region
        %s181 = smul.u32 4, %s11
        %p182 = scmp.lt.s32.totalorder %s181, 7
        %s183 = scalar_select %p182, %s181, 7
        %s184 = smul.addr %s183, 8
        %s185 = scalar_lea.vmem %s0, %s184
        %s186 = smul.u32 4, %s11
      $region36: #{tpu_custom_call.1} parent=31 // pred_fallthru
        _
    $region32: #{tpu_custom_call.1} parent=5 // pred_fallthru
      _
    %p187 = scmp.le.s32.totalorder 1, %s11
    %p188 = scmp.lt.s32.totalorder %s11, 3
    %p189 = pnand %p187, %p188
    %p190 = pneg %p189
    // Predicated region
    $region37: #{tpu_custom_call.1} parent=5 // pred_check
      _
    $region38: #{tpu_custom_call.1} parent=5 // pred_check_branch
      %192 = sbr.rel (%p189) target = $region40
    $region39: #{tpu_custom_call.1} parent=5 // pred_region
      %s193 = ssub.s32 %s11, 1
      %s194 = smul.u32 4, %s16
      %p195 = scmp.lt.s32.totalorder %s194, 7
      %s196 = scalar_select %p195, %s194, 7
      %s197 = smul.addr %s196, 8
      %s198 = scalar_lea.vmem %s0, %s197
      %p199 = pneg %p37
      %p200 = pneg %p34
      %p201 = pneg %p58
      %p202 = pneg %p55
      %p203 = pneg %p79
      %p204 = pneg %p76
      %p205 = pneg %p100
      %p206 = pneg %p97
      %p207 = pneg %p121
      %p208 = pneg %p118
      %p209 = pneg %p147
      %p210 = pneg %p144
      %s211 = smul.u32 4, %s16
      %p212 = scmp.lt.s32.totalorder %s211, 7
      %s213 = scalar_select %p212, %s211, 7
      %s214 = smul.addr %s213, 8
      %s215 = scalar_lea.vmem %s5, %s214
      %s216 = smul.u32 4, %s16
      %p217 = scmp.lt.s32.totalorder %s216, 7
      %s218 = scalar_select %p217, %s216, 7
      %s219 = smul.addr %s218, 8
      %s220 = scalar_lea.vmem %s0, %s219
      %s221 = smul.u32 4, %s16
      %s222 = smul.u32 4, %s16
      %p223 = scmp.lt.s32.totalorder %s222, 7
      %s224 = scalar_select %p223, %s222, 7
      %s225 = smul.addr %s224, 8
      %s226 = scalar_lea.vmem %s5, %s225
      %s227 = smul.u32 4, %s16
      %v228 = vld [vmem:[%s220] sm:$0xff]
      %v229 = vld [vmem:[%s220 + $0x8] sm:$0xff]
      %v230 = vld [vmem:[%s220 + $0x10] sm:$0xff]
      %v231 = vld [vmem:[%s220 + $0x18] sm:$0xff]
      %v232 = vld [vmem:[%s1] sm:$0xff]
      %v233 = vld [vmem:[%s1 + $0x8] sm:$0xff]
      %v234 = vld [vmem:[%s1 + $0x10] sm:$0xff]
      %v235 = vld [vmem:[%s1 + $0x18] sm:$0xff]
      %v236 = vld [vmem:[%s1 + $0x20] sm:$0xff]
      %v237 = vld [vmem:[%s1 + $0x28] sm:$0xff]
      %v238 = vld [vmem:[%s1 + $0x30] sm:$0xff]
      %v239 = vld [vmem:[%s1 + $0x38] sm:$0xff]
      %v240 = vld [vmem:[%s1 + $0x40] sm:$0xff]
      %v241 = vld [vmem:[%s1 + $0x48] sm:$0xff]
      %v242 = vld [vmem:[%s1 + $0x50] sm:$0xff]
      %v243 = vld [vmem:[%s1 + $0x58] sm:$0xff]
      %v244 = vld [vmem:[%s1 + $0x60] sm:$0xff]
      %v245 = vld [vmem:[%s1 + $0x68] sm:$0xff]
      %v246 = vld [vmem:[%s1 + $0x70] sm:$0xff]
      %v247 = vld [vmem:[%s1 + $0x78] sm:$0xff]
      %v248 = vld [vmem:[%s2] sm:$0x1]
      %v250 = vlaneseq
      %v251 = vshrl.u32 %v250, 7
      %v252 = vsub.s32 0, %v251
      %v253 = vrot.slane %v248, %v252
      %255 = vmatprep.subr.mxu0 0.0
      %256 = vmatpush1.msra.mxu0 %v232
      %257 = vmatprep.subr.mxu0 0.0
      %258 = vmatpush1.msra.mxu0 %v233
      %259 = vmatprep.subr.mxu0 0.0
      %260 = vmatpush1.msra.mxu0 %v234
      %261 = vmatprep.subr.mxu0 0.0
      %262 = vmatpush1.msra.mxu0 %v235
      %263 = vmatprep.subr.mxu0 0.0
      %264 = vmatpush1.msra.mxu0 %v236
      %265 = vmatprep.subr.mxu0 0.0
      %266 = vmatpush1.msra.mxu0 %v237
      %267 = vmatprep.subr.mxu0 0.0
      %268 = vmatpush1.msra.mxu0 %v238
      %269 = vmatprep.subr.mxu0 0.0
      %270 = vmatpush1.msra.mxu0 %v239
      %271 = vmatprep.subr.mxu0 0.0
      %272 = vmatpush1.msra.mxu0 %v240
      %273 = vmatprep.subr.mxu0 0.0
      %274 = vmatpush1.msra.mxu0 %v241
      %275 = vmatprep.subr.mxu0 0.0
      %276 = vmatpush1.msra.mxu0 %v242
      %277 = vmatprep.subr.mxu0 0.0
      %278 = vmatpush1.msra.mxu0 %v243
      %279 = vmatprep.subr.mxu0 0.0
      %280 = vmatpush1.msra.mxu0 %v244
      %281 = vmatprep.subr.mxu0 0.0
      %282 = vmatpush1.msra.mxu0 %v245
      %283 = vmatprep.subr.mxu0 0.0
      %284 = vmatpush1.msra.mxu0 %v246
      %285 = vmatprep.subr.mxu0 0.0
      %286 = vmatpush1.msra.mxu0 %v247
      %287 = vmatprep.subr.mxu0 0.0
      %288 = vmatpush1.msra.mxu0 0.0
      %289 = vmatprep.subr.mxu0 0.0
      %290 = vmatpush1.msra.mxu0 0.0
      %291 = vmatprep.subr.mxu0 0.0
      %292 = vmatpush1.msra.mxu0 0.0
      %293 = vmatprep.subr.mxu0 0.0
      %294 = vmatpush1.msra.mxu0 0.0
      %295 = vmatprep.subr.mxu0 0.0
      %296 = vmatpush1.msra.mxu0 0.0
      %297 = vmatprep.subr.mxu0 0.0
      %298 = vmatpush1.msra.mxu0 0.0
      %299 = vmatprep.subr.mxu0 0.0
      %300 = vmatpush1.msra.mxu0 0.0
      %301 = vmatprep.subr.mxu0 0.0
      %302 = vmatpush1.msra.mxu0 0.0
      %303 = vmatprep.subr.mxu0 0.0
      %304 = vmatpush1.msra.mxu0 0.0
      %305 = vmatprep.subr.mxu0 0.0
      %306 = vmatpush1.msra.mxu0 0.0
      %307 = vmatprep.subr.mxu0 0.0
      %308 = vmatpush1.msra.mxu0 0.0
      %309 = vmatprep.subr.mxu0 0.0
      %310 = vmatpush1.msra.mxu0 0.0
      %311 = vmatprep.subr.mxu0 0.0
      %312 = vmatpush1.msra.mxu0 0.0
      %313 = vmatprep.subr.mxu0 0.0
      %314 = vmatpush1.msra.mxu0 0.0
      %315 = vmatprep.subr.mxu0 0.0
      %316 = vmatpush1.msra.mxu0 0.0
      %317 = vmatprep.subr.mxu0 0.0
      %318 = vmatpush1.msra.mxu0 0.0
      %319 = vmatprep.mubr.f32.mxu0 0.0
      %320 = vmatmul.mubr.f32.gmra.mrb[0].mxu0 %v228
      %v321 = vpop.f32.mrb[0].mxu0
      %v322 = vadd.f32 %v253, %v321
      %v323 = vpop.f32.mrb[0].mxu0
      %324 = vmatprep.mubr.f32.mxu0 0.0
      %325 = vmatmul.mubr.f32.gmra.mrb[0].mxu0 %v229
      %v326 = vpop.f32.mrb[0].mxu0
      %v327 = vadd.f32 %v253, %v326
      %v328 = vpop.f32.mrb[0].mxu0
      %329 = vmatprep.mubr.f32.mxu0 0.0
      %330 = vmatmul.mubr.f32.gmra.mrb[0].mxu0 %v230
      %v331 = vpop.f32.mrb[0].mxu0
      %v332 = vadd.f32 %v253, %v331
      %v333 = vpop.f32.mrb[0].mxu0
      %334 = vmatprep.mubr.f32.mxu0 0.0
      %335 = vmatmul.mubr.f32.gmra.mrb[0].mxu0 %v231
      %v336 = vpop.f32.mrb[0].mxu0
      %v337 = vadd.f32 %v253, %v336
      %v338 = vpop.f32.mrb[0].mxu0
      %339 = vdwg.mxu0
      %v340 = vxor.u32 %v322, 2147483648
      %v341 = vxor.u32 %v327, 2147483648
      %v342 = vxor.u32 %v332, 2147483648
      %v343 = vxor.u32 %v337, 2147483648
      %v344 = vmul.f32 %v340, 1.442695
      %v345 = vpow.pop %v344
      %v346 = vmul.f32 %v341, 1.442695
      %v347 = vpow.pop %v346
      %v348 = vmul.f32 %v342, 1.442695
      %v349 = vpow.pop %v348
      %v350 = vmul.f32 %v343, 1.442695
      %v351 = vpow.pop %v350
      %v352 = vadd.f32 %v345, 1.0
      %v353 = vadd.f32 %v347, 1.0
      %v354 = vadd.f32 %v349, 1.0
      %v355 = vadd.f32 %v351, 1.0
      %v356 = vrcp.pop %v352
      %v357 = vmul.f32 1.0, %v356
      %v358 = vrcp.pop %v353
      %v359 = vmul.f32 1.0, %v358
      %v360 = vrcp.pop %v354
      %v361 = vmul.f32 1.0, %v360
      %v362 = vrcp.pop %v355
      %v363 = vmul.f32 1.0, %v362
      %v364 = vld [vmem:[%s3] sm:$0xff]
      %v365 = vld [vmem:[%s3 + $0x8] sm:$0xff]
      %v366 = vld [vmem:[%s3 + $0x10] sm:$0xff]
      %v367 = vld [vmem:[%s3 + $0x18] sm:$0xff]
      %v368 = vld [vmem:[%s3 + $0x20] sm:$0xff]
      %v369 = vld [vmem:[%s3 + $0x28] sm:$0xff]
      %v370 = vld [vmem:[%s3 + $0x30] sm:$0xff]
      %v371 = vld [vmem:[%s3 + $0x38] sm:$0xff]
      %v372 = vld [vmem:[%s3 + $0x40] sm:$0xff]
      %v373 = vld [vmem:[%s3 + $0x48] sm:$0xff]
      %v374 = vld [vmem:[%s3 + $0x50] sm:$0xff]
      %v375 = vld [vmem:[%s3 + $0x58] sm:$0xff]
      %v376 = vld [vmem:[%s4] sm:$0x1]
      %v378 = vlaneseq
      %v379 = vshrl.u32 %v378, 7
      %v380 = vsub.s32 0, %v379
      %v381 = vrot.slane %v376, %v380
      %vm383 = vcmask 785408
      %v385 = vsel %vm383, %v357, 0
      %v388 = vsel %vm383, %v359, 0
      %v391 = vsel %vm383, %v361, 0
      %v394 = vsel %vm383, %v363, 0
      %396 = vmatprep.subr.mxu0 0.0
      %397 = vmatpush1.msra.mxu0 %v364
      %398 = vmatprep.subr.mxu0 0.0
      %399 = vmatpush1.msra.mxu0 %v365
      %400 = vmatprep.subr.mxu0 0.0
      %401 = vmatpush1.msra.mxu0 %v366
      %402 = vmatprep.subr.mxu0 0.0
      %403 = vmatpush1.msra.mxu0 %v367
      %404 = vmatprep.subr.mxu0 0.0
      %405 = vmatpush1.msra.mxu0 %v368
      %406 = vmatprep.subr.mxu0 0.0
      %407 = vmatpush1.msra.mxu0 %v369
      %408 = vmatprep.subr.mxu0 0.0
      %409 = vmatpush1.msra.mxu0 %v370
      %410 = vmatprep.subr.mxu0 0.0
      %411 = vmatpush1.msra.mxu0 %v371
      %412 = vmatprep.subr.mxu0 0.0
      %413 = vmatpush1.msra.mxu0 %v372
      %414 = vmatprep.subr.mxu0 0.0
      %415 = vmatpush1.msra.mxu0 %v373
      %416 = vmatprep.subr.mxu0 0.0
      %417 = vmatpush1.msra.mxu0 %v374
      %418 = vmatprep.subr.mxu0 0.0
      %419 = vmatpush1.msra.mxu0 %v375
      %420 = vmatprep.subr.mxu0 0.0
      %421 = vmatpush1.msra.mxu0 0.0
      %422 = vmatprep.subr.mxu0 0.0
      %423 = vmatpush1.msra.mxu0 0.0
      %424 = vmatprep.subr.mxu0 0.0
      %425 = vmatpush1.msra.mxu0 0.0
      %426 = vmatprep.subr.mxu0 0.0
      %427 = vmatpush1.msra.mxu0 0.0
      %428 = vmatprep.subr.mxu0 0.0
      %429 = vmatpush1.msra.mxu0 0.0
      %430 = vmatprep.subr.mxu0 0.0
      %431 = vmatpush1.msra.mxu0 0.0
      %432 = vmatprep.subr.mxu0 0.0
      %433 = vmatpush1.msra.mxu0 0.0
      %434 = vmatprep.subr.mxu0 0.0
      %435 = vmatpush1.msra.mxu0 0.0
      %436 = vmatprep.subr.mxu0 0.0
      %437 = vmatpush1.msra.mxu0 0.0
      %438 = vmatprep.subr.mxu0 0.0
      %439 = vmatpush1.msra.mxu0 0.0
      %440 = vmatprep.subr.mxu0 0.0
      %441 = vmatpush1.msra.mxu0 0.0
      %442 = vmatprep.subr.mxu0 0.0
      %443 = vmatpush1.msra.mxu0 0.0
      %444 = vmatprep.subr.mxu0 0.0
      %445 = vmatpush1.msra.mxu0 0.0
      %446 = vmatprep.subr.mxu0 0.0
      %447 = vmatpush1.msra.mxu0 0.0
      %448 = vmatprep.subr.mxu0 0.0
      %449 = vmatpush1.msra.mxu0 0.0
      %450 = vmatprep.subr.mxu0 0.0
      %451 = vmatpush1.msra.mxu0 0.0
      %452 = vmatprep.subr.mxu0 0.0
      %453 = vmatpush1.msra.mxu0 0.0
      %454 = vmatprep.subr.mxu0 0.0
      %455 = vmatpush1.msra.mxu0 0.0
      %456 = vmatprep.subr.mxu0 0.0
      %457 = vmatpush1.msra.mxu0 0.0
      %458 = vmatprep.subr.mxu0 0.0
      %459 = vmatpush1.msra.mxu0 0.0
      %460 = vmatprep.mubr.f32.mxu0 0.0
      %461 = vmatmul.mubr.f32.gmra.mrb[0].mxu0 %v385
      %v462 = vpop.f32.mrb[0].mxu0
      %v463 = vadd.f32 %v381, %v462
      %v464 = vpop.f32.mrb[0].mxu0
      %465 = vmatprep.mubr.f32.mxu0 0.0
      %466 = vmatmul.mubr.f32.gmra.mrb[0].mxu0 %v388
      %v467 = vpop.f32.mrb[0].mxu0
      %v468 = vadd.f32 %v381, %v467
      %v469 = vpop.f32.mrb[0].mxu0
      %470 = vmatprep.mubr.f32.mxu0 0.0
      %471 = vmatmul.mubr.f32.gmra.mrb[0].mxu0 %v391
      %v472 = vpop.f32.mrb[0].mxu0
      %v473 = vadd.f32 %v381, %v472
      %v474 = vpop.f32.mrb[0].mxu0
      %475 = vmatprep.mubr.f32.mxu0 0.0
      %476 = vmatmul.mubr.f32.gmra.mrb[0].mxu0 %v394
      %v477 = vpop.f32.mrb[0].mxu0
      %v478 = vadd.f32 %v381, %v477
      %v479 = vpop.f32.mrb[0].mxu0
      %480 = vdwg.mxu0
      %v481 = vxor.u32 %v463, 2147483648
      %v482 = vxor.u32 %v468, 2147483648
      %v483 = vxor.u32 %v473, 2147483648
      %v484 = vxor.u32 %v478, 2147483648
      %v485 = vmul.f32 %v481, 1.442695
      %v486 = vpow.pop %v485
      %v487 = vmul.f32 %v482, 1.442695
      %v488 = vpow.pop %v487
      %v489 = vmul.f32 %v483, 1.442695
      %v490 = vpow.pop %v489
      %v491 = vmul.f32 %v484, 1.442695
      %v492 = vpow.pop %v491
      %v493 = vadd.f32 %v486, 1.0
      %v494 = vadd.f32 %v488, 1.0
      %v495 = vadd.f32 %v490, 1.0
      %v496 = vadd.f32 %v492, 1.0
      %v497 = vrcp.pop %v493
      %v498 = vmul.f32 1.0, %v497
      %v499 = vrcp.pop %v494
      %v500 = vmul.f32 1.0, %v499
      %v501 = vrcp.pop %v495
      %v502 = vmul.f32 1.0, %v501
      %v503 = vrcp.pop %v496
      %v504 = vmul.f32 1.0, %v503
      %vm505 = vcmask 261120
      %506 = vst.msk [vmem:[%s226] sm:$0xff] %vm505, %v498
      %507 = vst.msk [vmem:[%s226 + $0x8] sm:$0xff] %vm505, %v500
      %508 = vst.msk [vmem:[%s226 + $0x10] sm:$0xff] %vm505, %v502
      %509 = vst.msk [vmem:[%s226 + $0x18] sm:$0xff] %vm505, %v504
      %s510 = smul.u32 4, %s16
      %p511 = scmp.lt.s32.totalorder %s510, 7
      %s512 = scalar_select %p511, %s510, 7
      %s513 = smul.addr %s512, 8
      %s514 = scalar_lea.vmem %s5, %s513
      // Predicated region
      $region41: #{tpu_custom_call.1} parent=39 // pred_check
        %p515 = pneg %p144
      $region42: #{tpu_custom_call.1} parent=39 // pred_check_branch
        %517 = sbr.rel (%p515) target = $region44
      $region43: #{tpu_custom_call.1} parent=39 // pred_region
        %s518 = smul.u32 4, %s16
      $region44: #{tpu_custom_call.1} parent=39 // pred_fallthru
        _
    $region40: #{tpu_custom_call.1} parent=5 // pred_fallthru
      _
    %p519 = scmp.le.s32.totalorder 2, %s11
    // Predicated region
    $region45: #{tpu_custom_call.1} parent=5 // pred_check
      %p520 = pneg %p519
    $region46: #{tpu_custom_call.1} parent=5 // pred_check_branch
      %522 = sbr.rel (%p520) target = $region48
    $region47: #{tpu_custom_call.1} parent=5 // pred_region
      %s523 = ssub.s32 %s11, 2
      // Predicated region
      $region49: #{tpu_custom_call.1} parent=47 // pred_check
        %p524 = pneg %p150
      $region50: #{tpu_custom_call.1} parent=47 // pred_check_branch
        %526 = sbr.rel (%p524) target = $region52
      $region51: #{tpu_custom_call.1} parent=47 // pred_region
        %s527 = smul.u32 4, %s17
        %p528 = scmp.lt.s32.totalorder %s527, 7
        %s529 = scalar_select %p528, %s527, 7
        %s530 = smul.addr %s529, 8
        %s531 = scalar_lea.vmem %s5, %s530
      $region52: #{tpu_custom_call.1} parent=47 // pred_fallthru
        _
    $region48: #{tpu_custom_call.1} parent=5 // pred_fallthru
      _
  $region6: #{tpu_custom_call.1} parent=0 // loop_footer
    %s15 = sadd.s32 1, %s11
  $region7: #{tpu_custom_call.1} parent=0 // loop_footer_branch
    %10 = sbr.rel target = $region3
  $region8: #{tpu_custom_call.1} parent=0 // loop_exit
    _

</llo_original>
